<compile_context>
chip_gen: v5e
topology: v5e:2x2
jax: 0.10.0
libtpu: 0.0.40
codegen_flags: <defaults>
</compile_context>

<pallas_src>
import functools
import math

import jax
import jax.numpy as jnp
from jax.experimental import pallas as pl
from jax.experimental.pallas import tpu as pltpu


DEFAULT_MASK_VALUE = -0.7 * float(jnp.finfo(jnp.float32).max)
_VMEM_LIMIT = 48 * 1024 * 1024   # headroom below v7x's 64 MiB/TC physical VMEM


def _pick_tile(dim, target, align):
    """Largest multiple of `align` that divides `dim` and is <= `target`.

    Returns `dim` itself when dim <= target (full dim is always legal).
    Returns None when no aligned divisor exists — caller must pad.
    """
    if dim <= target:
        return dim
    t = (min(target, dim) // align) * align
    while t >= align:
        if dim % t == 0:
            return t
        t -= align
    return None


def _seq_tile(dim, target):
    """Largest divisor of `dim` <= target (>= 8); falls back to the full dim."""
    if dim <= target:
        return dim
    for t in range(target, 7, -1):
        if dim % t == 0:
            return t
    return dim  # awkward (e.g. prime) sequence length: single exact tile


def _default_kv_tile():
    # 256-wide kv tiles fill the 256x256 MXUs on v6e / v7x; v5e's MXU is 128-wide.
    try:
        kind = jax.devices()[0].device_kind.lower()
        if "v5 lite" in kind or "v5e" in kind or "v5litepod" in kind:
            return 128
    except Exception:
        pass
    return 256


# ---------------------------------------------------------------------------
# 1) Projection: y = x @ W^T + b   (tiled matmul, f32 VMEM accumulator)
# ---------------------------------------------------------------------------
def _linear_bias_kernel(x_ref, w_ref, b_ref, o_ref, acc_ref):
    @pl.when(pl.program_id(2) == 0)
    def _():
        acc_ref[...] = jnp.zeros(acc_ref.shape, acc_ref.dtype)

    acc_ref[...] += jnp.dot(x_ref[...], w_ref[...],
                            preferred_element_type=jnp.float32)

    @pl.when(pl.program_id(2) == pl.num_programs(2) - 1)
    def _():
        o_ref[...] = (acc_ref[...] + b_ref[...]).astype(o_ref.dtype)


def linear_pallas(x2d, w_t, b, *, tm=256, tn=512, tk=512):
    """y = x2d @ w_t + b, x2d: (M, K), w_t: (K, N), b: (N,)."""
    M, K = x2d.shape
    K2, N = w_t.shape
    assert K == K2 and b.shape == (N,)

    tn = _pick_tile(N, tn, 128) or N     # lane dim: multiple of 128 or full
    tk = _pick_tile(K, tk, 8) or K       # sublane dim of the weight block
    tm_sel = _pick_tile(M, tm, 8)

    orig_m = M
    if tm_sel is None:                   # awkward M: pad rows, never a giant tile
        tm_sel = min(tm, 256)
        m_pad = -(-M // tm_sel) * tm_sel
        x2d = jnp.pad(x2d, ((0, m_pad - M), (0, 0)))
        M = m_pad
    tm = tm_sel

    b2d = b.reshape(1, N)
    out = pl.pallas_call(
        _linear_bias_kernel,
        out_shape=jax.ShapeDtypeStruct((M, N), x2d.dtype),
        grid_spec=pltpu.PrefetchScalarGridSpec(
            num_scalar_prefetch=0,
            grid=(M // tm, N // tn, K // tk),
            in_specs=[
                pl.BlockSpec((tm, tk), lambda i, j, k: (i, k)),
                pl.BlockSpec((tk, tn), lambda i, j, k: (k, j)),
                pl.BlockSpec((1, tn), lambda i, j, k: (0, j)),
            ],
            out_specs=pl.BlockSpec((tm, tn), lambda i, j, k: (i, j)),
            scratch_shapes=[pltpu.VMEM((tm, tn), jnp.float32)],
        ),
        compiler_params=pltpu.CompilerParams(
            dimension_semantics=("parallel", "parallel", "arbitrary"),
            vmem_limit_bytes=_VMEM_LIMIT),
    )(x2d, w_t, b2d)
    if M != orig_m:
        out = out[:orig_m]
    return out


# ---------------------------------------------------------------------------
# 2) Flash-attention forward, grid = (B, q-tiles, kv-tiles), heads looped
#    inside the kernel so q/kv are read straight from the projection outputs
#    (layouts (B,S,H,hd) and (B,S,2H,hd)) with no HBM reshuffles.
# ---------------------------------------------------------------------------
def _mha_fwd_kernel(q_ref, kv_ref, o_ref, m_sc, l_sc, acc_sc, *,
                    n_heads, causal, tq, tkv):
    qi = pl.program_id(1)
    ki = pl.program_id(2)

    @pl.when(ki == 0)
    def _init():
        m_sc[...] = jnp.full(m_sc.shape, -jnp.inf, dtype=m_sc.dtype)
        l_sc[...] = jnp.zeros(l_sc.shape, l_sc.dtype)
        acc_sc[...] = jnp.zeros(acc_sc.shape, acc_sc.dtype)

    def _step(apply_mask):
        if apply_mask:   # only traced for diagonal-straddling tiles
            row = qi * tq + jax.lax.broadcasted_iota(jnp.int32, (tq, tkv), 0)
            col = ki * tkv + jax.lax.broadcasted_iota(jnp.int32, (tq, tkv), 1)
            keep = row >= col
        for h in range(n_heads):
            # q is pre-scaled by 1/sqrt(hd) (folded into the projection weights).
            # Stored dtype goes straight to the MXU; accumulate in f32.
            q = q_ref[:, h, :]                      # (tq, hd)
            k = kv_ref[:, h, :]                     # (tkv, hd)
            v = kv_ref[:, n_heads + h, :]           # (tkv, hd)
            s = jax.lax.dot_general(q, k, (((1,), (1,)), ((), ())),
                                    preferred_element_type=jnp.float32)
            if apply_mask:
                s = jnp.where(keep, s, DEFAULT_MASK_VALUE)
            m_prev = m_sc[h]
            m_new = jnp.maximum(m_prev, s.max(axis=-1, keepdims=True))
            alpha = jnp.exp(m_prev - m_new)
            p = jnp.exp(s - m_new)
            l_sc[h] = alpha * l_sc[h] + p.sum(axis=-1, keepdims=True)
            acc_sc[h] = alpha * acc_sc[h] + jax.lax.dot_general(
                p.astype(v.dtype), v, (((1,), (0,)), ((), ())),
                preferred_element_type=jnp.float32)
            m_sc[h] = m_new

    if causal:
        has_work = ki * tkv <= qi * tq + (tq - 1)        # min col <= max row
        no_mask_needed = (ki + 1) * tkv - 1 <= qi * tq   # max col <= min row
        pl.when(jnp.logical_and(has_work, no_mask_needed))(
            lambda: _step(False))
        pl.when(jnp.logical_and(has_work, jnp.logical_not(no_mask_needed)))(
            lambda: _step(True))
    else:
        _step(False)

    @pl.when(ki == pl.num_programs(2) - 1)
    def _finalize():
        for h in range(n_heads):
            inv_l = pl.reciprocal(l_sc[h], approx=True)   # EUP slot, ~free
            o_ref[:, h, :] = (acc_sc[h] * inv_l).astype(o_ref.dtype)


def flash_attention_pallas(q4, kv4, *, causal, tq=128, tkv=None):
    """q4: (B, S, H, hd) pre-scaled; kv4: (B, S, 2H, hd) = [k_heads | v_heads]."""
    B, S, H, hd = q4.shape
    assert kv4.shape == (B, S, 2 * H, hd)

    if tkv is None:
        tkv = _default_kv_tile()
    tq = _seq_tile(S, tq)
    tkv = _seq_tile(S, tkv)
    n_q, n_kv = S // tq, S // tkv

    def q_map(b, qi, ki):
        return (b, qi, 0, 0)

    if causal:
        # Clamp the kv block index so above-diagonal tiles are never DMA'd
        # (compute for them is skipped by pl.when inside the kernel).
        def kv_map(b, qi, ki):
            last_needed = (qi * tq + tq - 1) // tkv
            return (b, jnp.minimum(ki, last_needed), 0, 0)
    else:
        def kv_map(b, qi, ki):
            return (b, ki, 0, 0)

    kernel = functools.partial(_mha_fwd_kernel, n_heads=H, causal=causal,
                               tq=tq, tkv=tkv)
    return pl.pallas_call(
        kernel,
        out_shape=jax.ShapeDtypeStruct((B, S, H, hd), q4.dtype),
        grid_spec=pltpu.PrefetchScalarGridSpec(
            num_scalar_prefetch=0,
            grid=(B, n_q, n_kv),
            in_specs=[
                pl.BlockSpec((None, tq, H, hd), q_map),
                pl.BlockSpec((None, tkv, 2 * H, hd), kv_map),
            ],
            out_specs=pl.BlockSpec((None, tq, H, hd), q_map),
            scratch_shapes=[
                pltpu.VMEM((H, tq, 1), jnp.float32),    # running max m (per head)
                pltpu.VMEM((H, tq, 1), jnp.float32),    # running denom l (per head)
                pltpu.VMEM((H, tq, hd), jnp.float32),   # output accumulator
            ],
        ),
        compiler_params=pltpu.CompilerParams(
            dimension_semantics=("parallel", "parallel", "arbitrary"),
            vmem_limit_bytes=_VMEM_LIMIT),
    )(q4, kv4)


# ---------------------------------------------------------------------------
# 3) Full MultiHeadAttention forward (inference, attn mask = None)
# ---------------------------------------------------------------------------
def multi_head_attention_pallas(x, w_qkv_t, b_qkv, *, n_heads, causal):
    """x: (B, S, E); w_qkv_t: (E, 3E) = to_qkv.weight.T; b_qkv: (3E,)."""
    B, S, E = x.shape
    assert E % n_heads == 0
    hd = E // n_heads
    scale = 1.0 / math.sqrt(hd)

    # Fold the softmax scale into the q projection (tiny one-time (E,E) op),
    # so no per-tile score scaling happens inside the attention kernel.
    wq_t = w_qkv_t[:, :E] * scale
    bq = b_qkv[:E] * scale
    wkv_t = w_qkv_t[:, E:]
    bkv = b_qkv[E:]

    x2d = x.reshape(B * S, E)
    q = linear_pallas(x2d, wq_t, bq)       # (B*S, E)   pre-scaled q
    kv = linear_pallas(x2d, wkv_t, bkv)    # (B*S, 2E)  [k | v]

    # Contiguous (metadata-only) reshapes — no transposes, no extra HBM passes.
    q4 = q.reshape(B, S, n_heads, hd)
    kv4 = kv.reshape(B, S, 2 * n_heads, hd)

    # TODO(synk): optional additive `attn` mask path not implemented (attn=None only).
    o = flash_attention_pallas(q4, kv4, causal=causal)

    # attn_dropout / out_dropout are identity at inference; the reference
    # forward never applies self.out, so no output projection here either.
    return o.reshape(B, S, E)


# ---------------------------------------------------------------------------
# Reference (pure JAX) and self-test
# ---------------------------------------------------------------------------
def reference_mha(x, w_qkv_t, b_qkv, n_heads, causal):
    B, S, E = x.shape
    hd = E // n_heads
    hp = jax.lax.Precision.HIGHEST
    qkv = jnp.dot(x, w_qkv_t, precision=hp) + b_qkv
    q, k, v = jnp.split(qkv, 3, axis=-1)

    def heads(t):
        return t.reshape(B, S, n_heads, hd).transpose(0, 2, 1, 3)

    q, k, v = heads(q), heads(k), heads(v)
    s = jnp.einsum('bhqd,bhkd->bhqk', q, k, precision=hp) / math.sqrt(hd)
    if causal:
        mask = jnp.tril(jnp.ones((S, S), dtype=bool))
        s = jnp.where(mask[None, None], s, -jnp.inf)
    p = jax.nn.softmax(s, axis=-1)
    o = jnp.einsum('bhqk,bhkd->bhqd', p, v, precision=hp)
    return o.transpose(0, 2, 1, 3).reshape(B, S, E)


if __name__ == "__main__":
    B, S, E, H = 2, 8, 32, 4   # batch=2, seq=8, emb_dim=32, n_heads=4
    key = jax.random.PRNGKey(0)
    kx, kw, kb = jax.random.split(key, 3)
    x = jax.random.normal(kx, (B, S, E), dtype=jnp.float32)
    w_qkv_t = jax.random.normal(kw, (E, 3 * E), dtype=jnp.float32) / math.sqrt(E)
    b_qkv = 0.01 * jax.random.normal(kb, (3 * E,), dtype=jnp.float32)

    for causal in (False, True):
        out = multi_head_attention_pallas(x, w_qkv_t, b_qkv,
                                          n_heads=H, causal=causal)
        out = jax.block_until_ready(out)
        ref = reference_mha(x, w_qkv_t, b_qkv, H, causal)
        assert out.shape == (B, S, E)
        assert jnp.allclose(out, ref, atol=5e-3, rtol=5e-3), (
            f"mismatch vs reference (causal={causal}), max err "
            f"{float(jnp.max(jnp.abs(out - ref)))}")

    print("KERNEL_OK")
</pallas_src>

<mosaic_0001>
module attributes {stable_mosaic.version = 11 : i64} {
  func.func @_linear_bias_kernel(%arg0: i32, %arg1: i32, %arg2: i32, %arg3: memref<16x32xf32, #tpu.memory_space<vmem>>, %arg4: memref<32x32xf32, #tpu.memory_space<vmem>>, %arg5: memref<1x32xf32, #tpu.memory_space<vmem>>, %arg6: memref<16x32xf32, #tpu.memory_space<vmem>>, %arg7: memref<16x32xf32, #tpu.memory_space<vmem>>) attributes {dimension_semantics = [#tpu.dimension_semantics<parallel>, #tpu.dimension_semantics<parallel>, #tpu.dimension_semantics<arbitrary>], iteration_bounds = array<i64: 1, 1, 1>, scalar_prefetch = 0 : i64, scratch_operands = 1 : i64, tpu.core_type = #tpu.core_type<tc>, window_params = [{transform_indices = @transform_0, window_bounds = array<i64: 16, 32>}, {transform_indices = @transform_1, window_bounds = array<i64: 32, 32>}, {transform_indices = @transform_2, window_bounds = array<i64: 1, 32>}, {transform_indices = @transform_3, window_bounds = array<i64: 16, 32>}]} {
    %c0_i32 = arith.constant 0 : i32
    %0 = arith.cmpi eq, %arg2, %c0_i32 : i32
    %1 = arith.extui %0 : i1 to i32
    %c0_i32_0 = arith.constant 0 : i32
    %2 = arith.cmpi ne, %1, %c0_i32_0 : i32
    scf.if %2 {
      %cst_10 = arith.constant 0.000000e+00 : f32
      %12 = vector.broadcast %cst_10 : f32 to vector<16x32xf32>
      %c0_11 = arith.constant 0 : index
      %c0_12 = arith.constant 0 : index
      %13 = vector.load %arg7[%c0_11, %c0_12] : memref<16x32xf32, #tpu.memory_space<vmem>>, vector<16x32xf32>
      tpu.vector_store %arg7[%c0_11, %c0_12], %12 {strides = array<i32>} : memref<16x32xf32, #tpu.memory_space<vmem>>, vector<16x32xf32>,
    } else {
    }
    %c0 = arith.constant 0 : index
    %c0_1 = arith.constant 0 : index
    %3 = vector.load %arg7[%c0, %c0_1] : memref<16x32xf32, #tpu.memory_space<vmem>>, vector<16x32xf32>
    %c0_2 = arith.constant 0 : index
    %c0_3 = arith.constant 0 : index
    %4 = vector.load %arg3[%c0_2, %c0_3] : memref<16x32xf32, #tpu.memory_space<vmem>>, vector<16x32xf32>
    %c0_4 = arith.constant 0 : index
    %c0_5 = arith.constant 0 : index
    %5 = vector.load %arg4[%c0_4, %c0_5] : memref<32x32xf32, #tpu.memory_space<vmem>>, vector<32x32xf32>
    %cst = arith.constant dense<0.000000e+00> : vector<16x32xf32>
    %6 = tpu.matmul %4, %5, %cst {dimension_numbers = #tpu.dot_dimension_numbers<[1], [0], [0], [1], [0, 0, 1, 1], [], []>} : vector<16x32xf32>, vector<32x32xf32>, vector<16x32xf32> -> vector<16x32xf32>
    %7 = arith.addf %3, %6 : vector<16x32xf32>
    %c0_6 = arith.constant 0 : index
    %c0_7 = arith.constant 0 : index
    %8 = vector.load %arg7[%c0_6, %c0_7] : memref<16x32xf32, #tpu.memory_space<vmem>>, vector<16x32xf32>
    tpu.vector_store %arg7[%c0_6, %c0_7], %7 {strides = array<i32>} : memref<16x32xf32, #tpu.memory_space<vmem>>, vector<16x32xf32>,
    %c0_i32_8 = arith.constant 0 : i32
    %9 = arith.cmpi eq, %arg2, %c0_i32_8 : i32
    %10 = arith.extui %9 : i1 to i32
    %c0_i32_9 = arith.constant 0 : i32
    %11 = arith.cmpi ne, %10, %c0_i32_9 : i32
    scf.if %11 {
      %c0_10 = arith.constant 0 : index
      %c0_11 = arith.constant 0 : index
      %12 = vector.load %arg7[%c0_10, %c0_11] : memref<16x32xf32, #tpu.memory_space<vmem>>, vector<16x32xf32>
      %c0_12 = arith.constant 0 : index
      %c0_13 = arith.constant 0 : index
      %13 = vector.load %arg5[%c0_12, %c0_13] : memref<1x32xf32, #tpu.memory_space<vmem>>, vector<1x32xf32>
      %14 = vector.broadcast %13 : vector<1x32xf32> to vector<16x32xf32>
      %15 = arith.addf %12, %14 : vector<16x32xf32>
      %c0_14 = arith.constant 0 : index
      %c0_15 = arith.constant 0 : index
      %16 = vector.load %arg6[%c0_14, %c0_15] : memref<16x32xf32, #tpu.memory_space<vmem>>, vector<16x32xf32>
      tpu.vector_store %arg6[%c0_14, %c0_15], %15 {strides = array<i32>} : memref<16x32xf32, #tpu.memory_space<vmem>>, vector<16x32xf32>,
    } else {
    }
    return
  }
  func.func @transform_0(%arg0: i32, %arg1: i32, %arg2: i32) -> (i32, i32) {
    %c0_i32 = arith.constant 0 : i32
    return %arg0, %arg2 : i32, i32
  }
  func.func @transform_1(%arg0: i32, %arg1: i32, %arg2: i32) -> (i32, i32) {
    %c0_i32 = arith.constant 0 : i32
    return %arg2, %arg1 : i32, i32
  }
  func.func @transform_2(%arg0: i32, %arg1: i32, %arg2: i32) -> (i32, i32) {
    %c0_i32 = arith.constant 0 : i32
    %c0_i32_0 = arith.constant 0 : i32
    return %c0_i32, %arg1 : i32, i32
  }
  func.func @transform_3(%arg0: i32, %arg1: i32, %arg2: i32) -> (i32, i32) {
    %c0_i32 = arith.constant 0 : i32
    return %arg0, %arg1 : i32, i32
  }
}

</mosaic_0001>

<llo_original>
// kernel: tpu_custom_call.1
$region0: #{tpu_custom_call.1}
  #allocation0 [shape = 'u32[]', space=smem, size = 0x4, offset = 0x4, fixed_abs, tag = 'smem constant byte address 0x4 - core index']
  #allocation1 [shape = 'u32[72,128]{1,0:T(1,128)}', space=vmem, size = 0x9000, scoped, tag = 'internal scratch']
  #allocation2 [shape = 'f32[16,32]{1,0:T(8,128)}', space=vmem, size = 0x2000, scoped, tag = 'scratch operand']
  %s0 = inlined_call_operand.hbm [shape: f32[16,32], index: 0, kind: input, shape index: {}]
  %s1 = inlined_call_operand.hbm [shape: f32[32,32], index: 1, kind: input, shape index: {}]
  %s2 = inlined_call_operand.vmem [shape: f32[1,32], index: 2, kind: input, shape index: {}]
  %s3 = inlined_call_operand.hbm [shape: f32[16,32], index: 3, kind: output, shape index: {}]
  %s4 = sld [smem:[#allocation0]]
  $region38: #{tpu_custom_call.1} parent=0
    _
  %s6 = ssub.s32 1, %s4
  %s7 = scalar_select 0, %s6, %s4
  $region1: #{tpu_custom_call.1} parent=0
    #allocation3 [shape = 'u8[8192]{0}', space=vmem, size = 0x2000, scoped, tag = 'input window, operand 0, single buffered']
    #allocation4 [shape = 's32[1]{0}', space=sflag, size = 0x4, scoped, tag = 'scoped memory for tpu_custom_call.1']
    #allocation5 [shape = 's32[1]{0}', space=sflag, size = 0x4, scoped, tag = 'scoped memory for tpu_custom_call.1']
    #allocation6 [shape = 'u8[16384]{0}', space=vmem, size = 0x4000, scoped, tag = 'input window, operand 1, single buffered']
    #allocation7 [shape = 's32[1]{0}', space=sflag, size = 0x4, scoped, tag = 'scoped memory for tpu_custom_call.1']
    #allocation8 [shape = 'u8[8192]{0}', space=vmem, size = 0x2000, scoped, tag = 'output window, operand 0, single buffered']
    %8 = vsyncpa [#allocation4], 0
    %9 = vsyncpa [#allocation7], 0
    %10 = vsyncpa [#allocation5], 0
    // Predicated region
    $region2: #{tpu_custom_call.1} parent=1 // pred_check
      _
    $region3: #{tpu_custom_call.1} parent=1 // pred_check_branch
      %12 = sbr.rel (0) target = $region5
    $region4: #{tpu_custom_call.1} parent=1 // pred_region
      %14 = vsyncadd [#allocation4], 0
      %s15 = sshll.u32 %s0, 4
      %s16 = int_to_ptr.hbm [resolvable:$true] %s15
      %s17 = sshll.u32 [#allocation3], 4
      %s18 = int_to_ptr.vmem [resolvable:$true] %s17
      %23 = dma.hbm_to_vmem [thread:$0]  %s16, 256, %s18, [#allocation4], 128, 128, 8
    $region5: #{tpu_custom_call.1} parent=1 // pred_fallthru
      _
    // Predicated region
    $region6: #{tpu_custom_call.1} parent=1 // pred_check
      _
    $region7: #{tpu_custom_call.1} parent=1 // pred_check_branch
      %25 = sbr.rel (0) target = $region9
    $region8: #{tpu_custom_call.1} parent=1 // pred_region
      %27 = vsyncadd [#allocation7], 0
      %s28 = sshll.u32 %s1, 4
      %s29 = int_to_ptr.hbm [resolvable:$true] %s28
      %s30 = sshll.u32 [#allocation6], 4
      %s31 = int_to_ptr.vmem [resolvable:$true] %s30
      %36 = dma.hbm_to_vmem [thread:$0]  %s29, 512, %s31, [#allocation7], 128, 128, 8
    $region9: #{tpu_custom_call.1} parent=1 // pred_fallthru
      _
    // Predicated region
    $region10: #{tpu_custom_call.1} parent=1 // pred_check
      _
    $region11: #{tpu_custom_call.1} parent=1 // pred_check_branch
      %38 = sbr.rel (0) target = $region13
    $region12: #{tpu_custom_call.1} parent=1 // pred_region
      _
    $region13: #{tpu_custom_call.1} parent=1 // pred_fallthru
      _
    // Predicated region
    $region14: #{tpu_custom_call.1} parent=1 // pred_check
      _
    $region15: #{tpu_custom_call.1} parent=1 // pred_check_branch
      %40 = sbr.rel (0) target = $region17
    $region16: #{tpu_custom_call.1} parent=1 // pred_region
      %42 = dma.done [#allocation4], 256
    $region17: #{tpu_custom_call.1} parent=1 // pred_fallthru
      _
    // Predicated region
    $region18: #{tpu_custom_call.1} parent=1 // pred_check
      _
    $region19: #{tpu_custom_call.1} parent=1 // pred_check_branch
      %44 = sbr.rel (0) target = $region21
    $region20: #{tpu_custom_call.1} parent=1 // pred_region
      %46 = dma.done [#allocation7], 512
    $region21: #{tpu_custom_call.1} parent=1 // pred_fallthru
      _
    %p47 = scmp.eq.s32.totalorder 0, 0
    // Predicated region
    $region22: #{tpu_custom_call.1} parent=1 // pred_check
      %p48 = pneg %p47
    $region23: #{tpu_custom_call.1} parent=1 // pred_check_branch
      %50 = sbr.rel (%p48) target = $region25
    $region24: #{tpu_custom_call.1} parent=1 // pred_region
      %vm51 = vcmask 261120
      %52 = vst.msk [vmem:[#allocation2] sm:$0xff] %vm51, 0.0
      %53 = vst.msk [vmem:[#allocation2 + $0x8] sm:$0xff] %vm51, 0.0
    $region25: #{tpu_custom_call.1} parent=1 // pred_fallthru
      _
    %v54 = vld [vmem:[#allocation2] sm:$0xff]
    %v55 = vld [vmem:[#allocation2 + $0x8] sm:$0xff]
    %v56 = vld [vmem:[#allocation3] sm:$0xff]
    %v57 = vld [vmem:[#allocation3 + $0x8] sm:$0xff]
    %v58 = vld [vmem:[#allocation6] sm:$0xff]
    %v59 = vld [vmem:[#allocation6 + $0x8] sm:$0xff]
    %v60 = vld [vmem:[#allocation6 + $0x10] sm:$0xff]
    %v61 = vld [vmem:[#allocation6 + $0x18] sm:$0xff]
    %vm62 = vcmask 261120
    %v64 = vsel %vm62, %v56, 0
    %v67 = vsel %vm62, %v57, 0
    %69 = vmatpush.msra.mxu0 0.0
    %70 = vmatpush.msra.mxu0 0.0
    %71 = vmatpush.msra.mxu0 0.0
    %72 = vmatpush.msra.mxu0 0.0
    %73 = vmatpush.msra.mxu0 0.0
    %74 = vmatpush.msra.mxu0 0.0
    %75 = vmatpush.msra.mxu0 0.0
    %76 = vmatpush.msra.mxu0 0.0
    %77 = vmatpush.msra.mxu0 0.0
    %78 = vmatpush.msra.mxu0 0.0
    %79 = vmatpush.msra.mxu0 0.0
    %80 = vmatpush.msra.mxu0 0.0
    %81 = vmatpush.msra.mxu0 %v61
    %82 = vmatpush.msra.mxu0 %v60
    %83 = vmatpush.msra.mxu0 %v59
    %84 = vmatpush.msra.mxu0 %v58
    %85 = vmatmul.f32.gmra.mxu0 %v64
    %v86 = vpop.f32.mrf.mxu0
    %v87 = vadd.f32 0.0, %v86
    %88 = vmatmul.f32.gmra.mxu0 %v67
    %v89 = vpop.f32.mrf.mxu0
    %v90 = vadd.f32 0.0, %v89
    %91 = vdwg.mxu0
    %v92 = vadd.f32 %v54, %v87
    %v93 = vadd.f32 %v55, %v90
    %94 = vst.msk [vmem:[#allocation2] sm:$0xff] %vm62, %v92
    %95 = vst.msk [vmem:[#allocation2 + $0x8] sm:$0xff] %vm62, %v93
    // Predicated region
    $region26: #{tpu_custom_call.1} parent=1 // pred_check
      %p96 = pneg %p47
    $region27: #{tpu_custom_call.1} parent=1 // pred_check_branch
      %98 = sbr.rel (%p96) target = $region29
    $region28: #{tpu_custom_call.1} parent=1 // pred_region
      %v99 = vld [vmem:[#allocation2] sm:$0xff]
      %v100 = vld [vmem:[#allocation2 + $0x8] sm:$0xff]
      %v101 = vld [vmem:[%s2] sm:$0x1]
      %v103 = vperm.slane %v101, 0
      %v105 = vadd.f32 %v99, %v103
      %v106 = vadd.f32 %v100, %v103
      %107 = vst.msk [vmem:[#allocation8] sm:$0xff] %vm62, %v105
      %108 = vst.msk [vmem:[#allocation8 + $0x8] sm:$0xff] %vm62, %v106
    $region29: #{tpu_custom_call.1} parent=1 // pred_fallthru
      _
    // Predicated region
    $region30: #{tpu_custom_call.1} parent=1 // pred_check
      _
    $region31: #{tpu_custom_call.1} parent=1 // pred_check_branch
      %110 = sbr.rel (0) target = $region33
    $region32: #{tpu_custom_call.1} parent=1 // pred_region
      %112 = vsyncadd [#allocation5], 0
      %s113 = sshll.u32 [#allocation8], 4
      %s114 = int_to_ptr.vmem [resolvable:$true] %s113
      %s115 = sshll.u32 %s3, 4
      %s116 = int_to_ptr.hbm [resolvable:$true] %s115
      %121 = dma.vmem_to_hbm [thread:$0]  %s114, 256, %s116, [#allocation5], 128, 128, 8
    $region33: #{tpu_custom_call.1} parent=1 // pred_fallthru
      _
    // Predicated region
    $region34: #{tpu_custom_call.1} parent=1 // pred_check
      _
    $region35: #{tpu_custom_call.1} parent=1 // pred_check_branch
      %123 = sbr.rel (0) target = $region37
    $region36: #{tpu_custom_call.1} parent=1 // pred_region
      %125 = dma.done [#allocation5], 256
    $region37: #{tpu_custom_call.1} parent=1 // pred_fallthru
      _
    %126 = vsyncpa [#allocation4], 1
    %127 = vsyncpa [#allocation7], 1
    %128 = vsyncpa [#allocation5], 1

</llo_original>
